<compile_context>
chip_gen: v7x
topology: tpu7x:2x2x1
jax: 0.10.0
libtpu: 0.0.40
codegen_flags: <defaults>
</compile_context>

<pallas_src>
import functools

import jax
import jax.numpy as jnp
from jax.experimental import pallas as pl
from jax.experimental.pallas import tpu as pltpu


def _mxu_lane_width() -> int:
    """128-lane packing on <=v5 (128x128 MXU), 256 on v6e/v7x (256x256 MXU)."""
    try:
        kind = jax.devices()[0].device_kind.lower()
    except Exception:
        return 128
    if any(tag in kind for tag in ("v6", "v7", "7x")):
        return 256
    return 128


def _group_mask(n_tokens: int, K: int):
    """Block-diagonal (n_tokens*K, n_tokens*K) mask: 1 where two lanes belong
    to the same packed token (per-token softmax denominator)."""
    ids = jnp.arange(n_tokens * K, dtype=jnp.int32) // K
    return (ids[:, None] == ids[None, :]).astype(jnp.float32)


_LANE_DENSE_OK = {}


def _lane_dense_supported(narrow_width: int) -> bool:
    """One-time cached probe: can Mosaic lower the in-kernel row-major
    reshape (8r, w) -> (r, 8w) used for the lane-dense output store?"""
    if narrow_width in _LANE_DENSE_OK:
        return _LANE_DENSE_OK[narrow_width]

    def _probe(x_ref, o_ref):
        o_ref[...] = x_ref[...].reshape(o_ref.shape)

    try:
        x = jnp.arange(64 * narrow_width, dtype=jnp.float32).reshape(64, narrow_width)
        out = pl.pallas_call(
            _probe,
            out_shape=jax.ShapeDtypeStruct((8, 8 * narrow_width), jnp.float32),
        )(x)
        ok = bool(jnp.array_equal(out.reshape(-1), x.reshape(-1)))
    except Exception:
        ok = False
    _LANE_DENSE_OK[narrow_width] = ok
    return ok


def pack_selector_params(params, *, P: int, compute_dtype=jnp.bfloat16):
    """Build block-diagonal (kron(I_P, W)) weights, tiled biases and softmax
    group masks ONCE per parameter set (hoisted out of the per-call path)."""
    w1, b1, w2, b2, w3, b3 = params
    E, H1 = w1.shape
    H2, K = w3.shape
    eye = jnp.eye(P, dtype=jnp.float32)

    def bd(w):  # block-diagonal packed weight in the MXU compute dtype
        return jnp.kron(eye, w.astype(jnp.float32)).astype(compute_dtype)

    def tile_bias(b, reps):
        return jnp.tile(jnp.reshape(b, (1, -1)).astype(jnp.float32), (1, reps))

    return {
        "P": P, "E": E, "H1": H1, "H2": H2, "K": K,
        "compute_dtype": compute_dtype,
        "w1p": bd(w1), "w2p": bd(w2), "w3p": bd(w3),
        "b1p": tile_bias(b1, P), "b2p": tile_bias(b2, P),
        "b3_narrow": tile_bias(b3, P), "b3_dense": tile_bias(b3, 8 * P),
        "gmask_narrow": _group_mask(P, K), "gmask_dense": _group_mask(8 * P, K),
    }


def _mlp_selector_kernel(x_ref, w1_ref, b1_ref, w2_ref, b2_ref,
                         w3_ref, b3_ref, gmask_ref, o_ref,
                         *, output_probs: bool, compute_dtype):
    # Cast x to the MXU dtype *inside* the kernel: the HBM read stays f32
    # (single pass over x, no wrapper-side astype).
    x = x_ref[...].astype(compute_dtype)

    # Linear 1 + ReLU (matmuls in compute_dtype, accumulate/elementwise in f32).
    h = jnp.dot(x, w1_ref[...], preferred_element_type=jnp.float32)
    h = jnp.maximum(h + b1_ref[...], 0.0)

    # Linear 2 + ReLU.
    h = jnp.dot(h.astype(compute_dtype), w2_ref[...],
                preferred_element_type=jnp.float32)
    h = jnp.maximum(h + b2_ref[...], 0.0)

    # Output linear -> (TMp, P*K) packed logits (K logits per packed token).
    logits = jnp.dot(h.astype(compute_dtype), w3_ref[...],
                     preferred_element_type=jnp.float32)

    # Lane-dense repack: fold 8 packed rows into one 8*P*K-lane row so the
    # bias add / softmax / store all run on full-width vregs and the store is
    # an unmasked vst.  (With the narrow fallback layout, o_ref has the same
    # shape as `logits` and this reshape is a no-op.)
    logits = logits.reshape(o_ref.shape)
    logits = logits + b3_ref[...]

    if output_probs:
        # Softmax over each token's K lanes.  A single shared per-row max is
        # a valid stabilizer for every token packed in the row; the per-token
        # denominator comes from a block-diagonal mask matmul so each lane
        # only sees its own token's sum.
        m = jnp.max(logits, axis=-1, keepdims=True)
        e = jnp.exp(logits - m)
        denom = jnp.dot(e, gmask_ref[...], preferred_element_type=jnp.float32)
        out = e * pl.reciprocal(denom, approx=True)
    else:
        out = logits

    o_ref[...] = out.astype(o_ref.dtype)


def mlp_selector_forward(x, packed, *, output_probs: bool = False,
                         tile_tokens: int = 32768, out_dtype=None):
    """x: (N, L, E).  packed: result of pack_selector_params.
    Returns (N, L, K) logits (or softmax probabilities)."""
    P, E = packed["P"], packed["E"]
    H1, H2, K = packed["H1"], packed["H2"], packed["K"]
    cdt = packed["compute_dtype"]
    odt = cdt if out_dtype is None else out_dtype

    N, L, E_in = x.shape
    assert E_in == E, f"expected input_dim={E}, got {E_in}"
    rows = N * L

    # Pad tokens only to a multiple of 8*P (packed sublane unit), NOT a full
    # tile: the ragged last grid block is masked on write by Pallas.
    unit = 8 * P
    padded_rows = int(pl.cdiv(rows, unit)) * unit
    x2d = x.reshape(rows, E)
    if padded_rows != rows:
        x2d = jnp.pad(x2d, ((0, padded_rows - rows), (0, 0)))
    Rp = padded_rows // P                      # packed rows (multiple of 8)
    xp = x2d.reshape(Rp, P * E)                # free reshape, dtype unchanged

    # Tile selection: large tiles to amortize ~0.35us/grid-step, aligned to
    # 128*P tokens (keeps the lane-dense out block's sublane dim a multiple
    # of 16 -> bf16-safe), capped so the grid keeps >= 4 steps when possible
    # (megacore sharding / both v7x TensorCores).
    tile_align = 16 * unit                     # 128*P tokens
    tt = int(tile_tokens)
    if tt >= padded_rows:
        tile_rows = padded_rows                # single step: blocks == arrays
    else:
        tile_rows = max(tile_align, (tt // tile_align) * tile_align)
        quarter = ((padded_rows // 4) // tile_align) * tile_align
        if quarter >= tile_align:
            tile_rows = min(tile_rows, quarter)
        tile_rows = min(tile_rows, padded_rows)
    TMp = tile_rows // P
    grid = (int(pl.cdiv(Rp, TMp)),)

    narrow_w = P * K
    dense_w = 8 * P * K
    if _lane_dense_supported(narrow_w):
        out_shape = jax.ShapeDtypeStruct((Rp // 8, dense_w), odt)
        out_spec = pl.BlockSpec((TMp // 8, dense_w), lambda i: (i, 0))
        b3p, gmask = packed["b3_dense"], packed["gmask_dense"]
    else:
        out_shape = jax.ShapeDtypeStruct((Rp, narrow_w), odt)
        out_spec = pl.BlockSpec((TMp, narrow_w), lambda i: (i, 0))
        b3p, gmask = packed["b3_narrow"], packed["gmask_narrow"]

    kernel = functools.partial(_mlp_selector_kernel,
                               output_probs=output_probs,
                               compute_dtype=cdt)

    out_packed = pl.pallas_call(
        kernel,
        out_shape=out_shape,
        grid_spec=pltpu.PrefetchScalarGridSpec(
            num_scalar_prefetch=0,
            grid=grid,
            in_specs=[
                pl.BlockSpec((TMp, P * E), lambda i: (i, 0)),       # x tile (f32)
                pl.BlockSpec((P * E, P * H1), lambda i: (0, 0)),    # W1 (blk-diag)
                pl.BlockSpec((1, P * H1), lambda i: (0, 0)),        # b1
                pl.BlockSpec((P * H1, P * H2), lambda i: (0, 0)),   # W2 (blk-diag)
                pl.BlockSpec((1, P * H2), lambda i: (0, 0)),        # b2
                pl.BlockSpec((P * H2, P * K), lambda i: (0, 0)),    # W3 (blk-diag)
                pl.BlockSpec((1, b3p.shape[1]), lambda i: (0, 0)),  # b3 (tiled)
                pl.BlockSpec(gmask.shape, lambda i: (0, 0)),        # softmax mask
            ],
            out_specs=out_spec,
        ),
        compiler_params=pltpu.CompilerParams(
            dimension_semantics=("parallel",)),
    )(xp, packed["w1p"], packed["b1p"], packed["w2p"], packed["b2p"],
      packed["w3p"], b3p, gmask)

    # Both output layouts flatten row-major to (padded_rows, K); drop padding.
    out2d = out_packed.reshape(padded_rows, K)
    if padded_rows != rows:
        out2d = out2d[:rows]
    return out2d.reshape(N, L, K)


def init_params(key, input_dim, hidden_dim, K):
    """Deterministic init. Weights stored as (in_dim, out_dim); biases (1, out_dim)."""
    dims = [input_dim] + list(hidden_dim) + [K]
    params = []
    for i in range(len(dims) - 1):
        key, kw, kb = jax.random.split(key, 3)
        fan_in = dims[i]
        bound = 1.0 / jnp.sqrt(fan_in)
        w = jax.random.uniform(kw, (dims[i], dims[i + 1]), jnp.float32, -bound, bound)
        b = jax.random.uniform(kb, (1, dims[i + 1]), jnp.float32, -bound, bound)
        params.extend([w, b])
    return tuple(params)


def reference_forward(x, params, output_probs=False):
    w1, b1, w2, b2, w3, b3 = params
    h = jnp.maximum(x @ w1 + b1, 0.0)
    h = jnp.maximum(h @ w2 + b2, 0.0)
    logits = h @ w3 + b3
    if output_probs:
        return jax.nn.softmax(logits, axis=-1)
    return logits


if __name__ == "__main__":
    # Shapes implied by the module: z is (N, L, E), output is (N, L, K).
    N, L, E = 2, 8, 32
    hidden_dim = (32, 32)
    K = 4

    key = jax.random.PRNGKey(0)
    key, kx = jax.random.split(key)
    x = jax.random.normal(kx, (N, L, E), dtype=jnp.float32)
    params = init_params(key, E, hidden_dim, K)

    ref_logits = reference_forward(x, params, output_probs=False)
    ref_probs = reference_forward(x, params, output_probs=True)

    # Tokens packed per 128/256-lane row (block-diagonal weights).
    P = max(1, _mxu_lane_width() // max(E, *hidden_dim))

    # f32-MXU path: tight correctness check against the pure-JAX reference.
    packed32 = pack_selector_params(params, P=P, compute_dtype=jnp.float32)
    logits32 = jax.block_until_ready(
        mlp_selector_forward(x, packed32, output_probs=False))
    probs32 = jax.block_until_ready(
        mlp_selector_forward(x, packed32, output_probs=True))
    assert logits32.shape == (N, L, K) and probs32.shape == (N, L, K)
    assert jnp.allclose(logits32.astype(jnp.float32), ref_logits, atol=1e-4, rtol=1e-4)
    assert jnp.allclose(probs32.astype(jnp.float32), ref_probs, atol=1e-3, rtol=1e-3)

    # Default fast path: bf16 MXU operands / bf16 output, f32 accumulation.
    packed = pack_selector_params(params, P=P, compute_dtype=jnp.bfloat16)
    logits = jax.block_until_ready(
        mlp_selector_forward(x, packed, output_probs=False))
    probs = jax.block_until_ready(
        mlp_selector_forward(x, packed, output_probs=True))
    assert logits.shape == (N, L, K) and probs.shape == (N, L, K)
    logits_f32 = logits.astype(jnp.float32)
    probs_f32 = probs.astype(jnp.float32)
    assert jnp.allclose(logits_f32, ref_logits, atol=5e-2, rtol=5e-2)
    assert jnp.allclose(probs_f32, ref_probs, atol=3e-2, rtol=3e-2)
    assert jnp.allclose(jnp.sum(probs_f32, axis=-1), 1.0, atol=2e-2)

    print("KERNEL_OK")
</pallas_src>

<mosaic_0001>
module attributes {stable_mosaic.version = 11 : i64} {
  func.func @_probe(%arg0: memref<64x16xf32, #tpu.memory_space<vmem>>, %arg1: memref<8x128xf32, #tpu.memory_space<vmem>>) attributes {dimension_semantics = [], scalar_prefetch = 0 : i64, scratch_operands = 0 : i64, tpu.core_type = #tpu.core_type<tc>} {
    %c0 = arith.constant 0 : index
    %c0_0 = arith.constant 0 : index
    %0 = vector.load %arg0[%c0, %c0_0] : memref<64x16xf32, #tpu.memory_space<vmem>>, vector<64x16xf32>
    %1 = vector.shape_cast %0 : vector<64x16xf32> to vector<8x128xf32>
    %c0_1 = arith.constant 0 : index
    %c0_2 = arith.constant 0 : index
    %2 = vector.load %arg1[%c0_1, %c0_2] : memref<8x128xf32, #tpu.memory_space<vmem>>, vector<8x128xf32>
    tpu.vector_store %arg1[%c0_1, %c0_2], %1 {strides = array<i32>} : memref<8x128xf32, #tpu.memory_space<vmem>>, vector<8x128xf32>,
    return
  }
}

module attributes {stable_mosaic.version = 11 : i64} {
  func.func @_mlp_selector_kernel(%arg0: i32, %arg1: memref<8x128xf32, #tpu.memory_space<vmem>>, %arg2: memref<128x128xf32, #tpu.memory_space<vmem>>, %arg3: memref<1x128xf32, #tpu.memory_space<vmem>>, %arg4: memref<128x128xf32, #tpu.memory_space<vmem>>, %arg5: memref<1x128xf32, #tpu.memory_space<vmem>>, %arg6: memref<128x16xf32, #tpu.memory_space<vmem>>, %arg7: memref<1x16xf32, #tpu.memory_space<vmem>>, %arg8: memref<16x16xf32, #tpu.memory_space<vmem>>, %arg9: memref<8x16xf32, #tpu.memory_space<vmem>>) attributes {dimension_semantics = [#tpu.dimension_semantics<parallel>], iteration_bounds = array<i64: 1>, scalar_prefetch = 0 : i64, scratch_operands = 0 : i64, tpu.core_type = #tpu.core_type<tc>, window_params = [{transform_indices = @transform_0, window_bounds = array<i64: 8, 128>}, {pipeline_mode = #tpu.pipeline_mode<synchronous>, transform_indices = @transform_1, window_bounds = array<i64: 128, 128>}, {pipeline_mode = #tpu.pipeline_mode<synchronous>, transform_indices = @transform_2, window_bounds = array<i64: 1, 128>}, {pipeline_mode = #tpu.pipeline_mode<synchronous>, transform_indices = @transform_3, window_bounds = array<i64: 128, 128>}, {pipeline_mode = #tpu.pipeline_mode<synchronous>, transform_indices = @transform_4, window_bounds = array<i64: 1, 128>}, {pipeline_mode = #tpu.pipeline_mode<synchronous>, transform_indices = @transform_5, window_bounds = array<i64: 128, 16>}, {pipeline_mode = #tpu.pipeline_mode<synchronous>, transform_indices = @transform_6, window_bounds = array<i64: 1, 16>}, {pipeline_mode = #tpu.pipeline_mode<synchronous>, transform_indices = @transform_7, window_bounds = array<i64: 16, 16>}, {transform_indices = @transform_8, window_bounds = array<i64: 8, 16>}]} {
    %c0 = arith.constant 0 : index
    %c0_0 = arith.constant 0 : index
    %0 = vector.load %arg1[%c0, %c0_0] : memref<8x128xf32, #tpu.memory_space<vmem>>, vector<8x128xf32>
    %c0_1 = arith.constant 0 : index
    %c0_2 = arith.constant 0 : index
    %1 = vector.load %arg2[%c0_1, %c0_2] : memref<128x128xf32, #tpu.memory_space<vmem>>, vector<128x128xf32>
    %cst = arith.constant dense<0.000000e+00> : vector<8x128xf32>
    %2 = tpu.matmul %0, %1, %cst {dimension_numbers = #tpu.dot_dimension_numbers<[1], [0], [0], [1], [0, 0, 1, 1], [], []>} : vector<8x128xf32>, vector<128x128xf32>, vector<8x128xf32> -> vector<8x128xf32>
    %c0_3 = arith.constant 0 : index
    %c0_4 = arith.constant 0 : index
    %3 = vector.load %arg3[%c0_3, %c0_4] : memref<1x128xf32, #tpu.memory_space<vmem>>, vector<1x128xf32>
    %4 = vector.broadcast %3 : vector<1x128xf32> to vector<8x128xf32>
    %5 = arith.addf %2, %4 : vector<8x128xf32>
    %cst_5 = arith.constant 0.000000e+00 : f32
    %6 = vector.broadcast %cst_5 : f32 to vector<8x128xf32>
    %7 = arith.maximumf %5, %6 : vector<8x128xf32>
    %c0_6 = arith.constant 0 : index
    %c0_7 = arith.constant 0 : index
    %8 = vector.load %arg4[%c0_6, %c0_7] : memref<128x128xf32, #tpu.memory_space<vmem>>, vector<128x128xf32>
    %cst_8 = arith.constant dense<0.000000e+00> : vector<8x128xf32>
    %9 = tpu.matmul %7, %8, %cst_8 {dimension_numbers = #tpu.dot_dimension_numbers<[1], [0], [0], [1], [0, 0, 1, 1], [], []>} : vector<8x128xf32>, vector<128x128xf32>, vector<8x128xf32> -> vector<8x128xf32>
    %c0_9 = arith.constant 0 : index
    %c0_10 = arith.constant 0 : index
    %10 = vector.load %arg5[%c0_9, %c0_10] : memref<1x128xf32, #tpu.memory_space<vmem>>, vector<1x128xf32>
    %11 = vector.broadcast %10 : vector<1x128xf32> to vector<8x128xf32>
    %12 = arith.addf %9, %11 : vector<8x128xf32>
    %cst_11 = arith.constant 0.000000e+00 : f32
    %13 = vector.broadcast %cst_11 : f32 to vector<8x128xf32>
    %14 = arith.maximumf %12, %13 : vector<8x128xf32>
    %c0_12 = arith.constant 0 : index
    %c0_13 = arith.constant 0 : index
    %15 = vector.load %arg6[%c0_12, %c0_13] : memref<128x16xf32, #tpu.memory_space<vmem>>, vector<128x16xf32>
    %cst_14 = arith.constant dense<0.000000e+00> : vector<8x16xf32>
    %16 = tpu.matmul %14, %15, %cst_14 {dimension_numbers = #tpu.dot_dimension_numbers<[1], [0], [0], [1], [0, 0, 1, 1], [], []>} : vector<8x128xf32>, vector<128x16xf32>, vector<8x16xf32> -> vector<8x16xf32>
    %c0_15 = arith.constant 0 : index
    %c0_16 = arith.constant 0 : index
    %17 = vector.load %arg7[%c0_15, %c0_16] : memref<1x16xf32, #tpu.memory_space<vmem>>, vector<1x16xf32>
    %18 = vector.broadcast %17 : vector<1x16xf32> to vector<8x16xf32>
    %19 = arith.addf %16, %18 : vector<8x16xf32>
    %c0_17 = arith.constant 0 : index
    %c0_18 = arith.constant 0 : index
    %20 = vector.load %arg9[%c0_17, %c0_18] : memref<8x16xf32, #tpu.memory_space<vmem>>, vector<8x16xf32>
    tpu.vector_store %arg9[%c0_17, %c0_18], %19 {strides = array<i32>} : memref<8x16xf32, #tpu.memory_space<vmem>>, vector<8x16xf32>,
    return
  }
  func.func @transform_0(%arg0: i32) -> (i32, i32) {
    %c0_i32 = arith.constant 0 : i32
    %c0_i32_0 = arith.constant 0 : i32
    return %arg0, %c0_i32 : i32, i32
  }
  func.func @transform_1(%arg0: i32) -> (i32, i32) {
    %c0_i32 = arith.constant 0 : i32
    %c0_i32_0 = arith.constant 0 : i32
    %c0_i32_1 = arith.constant 0 : i32
    return %c0_i32, %c0_i32_0 : i32, i32
  }
  func.func @transform_2(%arg0: i32) -> (i32, i32) {
    %c0_i32 = arith.constant 0 : i32
    %c0_i32_0 = arith.constant 0 : i32
    %c0_i32_1 = arith.constant 0 : i32
    return %c0_i32, %c0_i32_0 : i32, i32
  }
  func.func @transform_3(%arg0: i32) -> (i32, i32) {
    %c0_i32 = arith.constant 0 : i32
    %c0_i32_0 = arith.constant 0 : i32
    %c0_i32_1 = arith.constant 0 : i32
    return %c0_i32, %c0_i32_0 : i32, i32
  }
  func.func @transform_4(%arg0: i32) -> (i32, i32) {
    %c0_i32 = arith.constant 0 : i32
    %c0_i32_0 = arith.constant 0 : i32
    %c0_i32_1 = arith.constant 0 : i32
    return %c0_i32, %c0_i32_0 : i32, i32
  }
  func.func @transform_5(%arg0: i32) -> (i32, i32) {
    %c0_i32 = arith.constant 0 : i32
    %c0_i32_0 = arith.constant 0 : i32
    %c0_i32_1 = arith.constant 0 : i32
    return %c0_i32, %c0_i32_0 : i32, i32
  }
  func.func @transform_6(%arg0: i32) -> (i32, i32) {
    %c0_i32 = arith.constant 0 : i32
    %c0_i32_0 = arith.constant 0 : i32
    %c0_i32_1 = arith.constant 0 : i32
    return %c0_i32, %c0_i32_0 : i32, i32
  }
  func.func @transform_7(%arg0: i32) -> (i32, i32) {
    %c0_i32 = arith.constant 0 : i32
    %c0_i32_0 = arith.constant 0 : i32
    %c0_i32_1 = arith.constant 0 : i32
    return %c0_i32, %c0_i32_0 : i32, i32
  }
  func.func @transform_8(%arg0: i32) -> (i32, i32) {
    %c0_i32 = arith.constant 0 : i32
    %c0_i32_0 = arith.constant 0 : i32
    return %arg0, %c0_i32 : i32, i32
  }
}

</mosaic_0001>

<llo_original>
// kernel: tpu_custom_call.1
$region0: #{tpu_custom_call.1}
  #allocation0 [shape = 'u32[]', space=smem, size = 0x4, offset = 0x4, fixed_abs, tag = 'smem constant byte address 0x4 - core index']
  #allocation1 [shape = 'u32[144,128]{1,0:T(1,128)}', space=vmem, size = 0x12000, scoped, tag = 'internal scratch']
  %s0 = inlined_call_operand.hbm [shape: f32[8,128], index: 0, kind: input, shape index: {}]
  %s1 = inlined_call_operand.vmem [shape: f32[128,128], index: 1, kind: input, shape index: {}]
  %s2 = inlined_call_operand.vmem [shape: f32[1,128], index: 2, kind: input, shape index: {}]
  %s3 = inlined_call_operand.hbm [shape: f32[128,128], index: 3, kind: input, shape index: {}]
  %s4 = inlined_call_operand.vmem [shape: f32[1,128], index: 4, kind: input, shape index: {}]
  %s5 = inlined_call_operand.vmem [shape: f32[128,16], index: 5, kind: input, shape index: {}]
  %s6 = inlined_call_operand.vmem [shape: f32[1,16], index: 6, kind: input, shape index: {}]
  %s7 = inlined_call_operand.vmem [shape: f32[16,16], index: 7, kind: input, shape index: {}]
  %s8 = inlined_call_operand.hbm [shape: f32[8,16], index: 8, kind: output, shape index: {}]
  %s9 = sld [smem:[#allocation0]]
  $region50: #{tpu_custom_call.1} parent=0
    _
  %s11 = ssub.s32 1, %s9
  %s12 = scalar_select 0, %s11, %s9
  $region1: #{tpu_custom_call.1} parent=0
    #allocation2 [shape = 'u8[4096]{0}', space=vmem, size = 0x1000, scoped, tag = 'input window, operand 0, single buffered']
    #allocation3 [shape = 's32[1]{0}', space=sflag, size = 0x4, scoped, tag = 'scoped memory for tpu_custom_call.1']
    #allocation4 [shape = 's32[1]{0}', space=sflag, size = 0x4, scoped, tag = 'scoped memory for tpu_custom_call.1']
    #allocation5 [shape = 'u8[65536]{0}', space=vmem, size = 0x10000, scoped, tag = 'input window, operand 3, single buffered']
    #allocation6 [shape = 's32[1]{0}', space=sflag, size = 0x4, scoped, tag = 'scoped memory for tpu_custom_call.1']
    #allocation7 [shape = 'u8[4096]{0}', space=vmem, size = 0x1000, scoped, tag = 'output window, operand 0, single buffered']
    %13 = vsyncpa [#allocation3], 0
    %14 = vsyncpa [#allocation6], 0
    %15 = vsyncpa [#allocation4], 0
    // Predicated region
    $region2: #{tpu_custom_call.1} parent=1 // pred_check
      _
    $region3: #{tpu_custom_call.1} parent=1 // pred_check_branch
      %17 = sbr.rel (0) target = $region5
    $region4: #{tpu_custom_call.1} parent=1 // pred_region
      %s19 = ssub.s32 128, 128
      %20 = vsyncadd [#allocation3], %s19
      %s22 = sshll.u32 [#allocation2], 4
      %s23 = int_to_ptr.vmem [resolvable:$true] %s22
      %25 = dma.hbm_to_vmem [thread:$0]  %s0, 128, %s23, [#allocation3]
    $region5: #{tpu_custom_call.1} parent=1 // pred_fallthru
      _
    // Predicated region
    $region6: #{tpu_custom_call.1} parent=1 // pred_check
      _
    $region7: #{tpu_custom_call.1} parent=1 // pred_check_branch
      %27 = sbr.rel (0) target = $region9
    $region8: #{tpu_custom_call.1} parent=1 // pred_region
      _
    $region9: #{tpu_custom_call.1} parent=1 // pred_fallthru
      _
    // Predicated region
    $region10: #{tpu_custom_call.1} parent=1 // pred_check
      _
    $region11: #{tpu_custom_call.1} parent=1 // pred_check_branch
      %29 = sbr.rel (0) target = $region13
    $region12: #{tpu_custom_call.1} parent=1 // pred_region
      _
    $region13: #{tpu_custom_call.1} parent=1 // pred_fallthru
      _
    // Predicated region
    $region14: #{tpu_custom_call.1} parent=1 // pred_check
      _
    $region15: #{tpu_custom_call.1} parent=1 // pred_check_branch
      %31 = sbr.rel (0) target = $region17
    $region16: #{tpu_custom_call.1} parent=1 // pred_region
      %s33 = ssub.s32 2048, 2048
      %34 = vsyncadd [#allocation6], %s33
      %s35 = sshll.u32 [#allocation5], 4
      %s36 = int_to_ptr.vmem [resolvable:$true] %s35
      %41 = dma.hbm_to_vmem [thread:$0]  %s3, 2048, %s36, [#allocation6], 128, 128, 8
    $region17: #{tpu_custom_call.1} parent=1 // pred_fallthru
      _
    // Predicated region
    $region18: #{tpu_custom_call.1} parent=1 // pred_check
      _
    $region19: #{tpu_custom_call.1} parent=1 // pred_check_branch
      %43 = sbr.rel (0) target = $region21
    $region20: #{tpu_custom_call.1} parent=1 // pred_region
      _
    $region21: #{tpu_custom_call.1} parent=1 // pred_fallthru
      _
    // Predicated region
    $region22: #{tpu_custom_call.1} parent=1 // pred_check
      _
    $region23: #{tpu_custom_call.1} parent=1 // pred_check_branch
      %45 = sbr.rel (0) target = $region25
    $region24: #{tpu_custom_call.1} parent=1 // pred_region
      _
    $region25: #{tpu_custom_call.1} parent=1 // pred_fallthru
      _
    // Predicated region
    $region26: #{tpu_custom_call.1} parent=1 // pred_check
      _
    $region27: #{tpu_custom_call.1} parent=1 // pred_check_branch
      %47 = sbr.rel (0) target = $region29
    $region28: #{tpu_custom_call.1} parent=1 // pred_region
      _
    $region29: #{tpu_custom_call.1} parent=1 // pred_fallthru
      _
    // Predicated region
    $region30: #{tpu_custom_call.1} parent=1 // pred_check
      _
    $region31: #{tpu_custom_call.1} parent=1 // pred_check_branch
      %49 = sbr.rel (0) target = $region33
    $region32: #{tpu_custom_call.1} parent=1 // pred_region
      _
    $region33: #{tpu_custom_call.1} parent=1 // pred_fallthru
      _
    // Predicated region
    $region34: #{tpu_custom_call.1} parent=1 // pred_check
      _
    $region35: #{tpu_custom_call.1} parent=1 // pred_check_branch
      %51 = sbr.rel (0) target = $region37
    $region36: #{tpu_custom_call.1} parent=1 // pred_region
      %52 = dma.done [#allocation3], 128
    $region37: #{tpu_custom_call.1} parent=1 // pred_fallthru
      _
    // Predicated region
    $region38: #{tpu_custom_call.1} parent=1 // pred_check
      _
    $region39: #{tpu_custom_call.1} parent=1 // pred_check_branch
      %54 = sbr.rel (0) target = $region41
    $region40: #{tpu_custom_call.1} parent=1 // pred_region
      %55 = dma.done [#allocation6], 2048
    $region41: #{tpu_custom_call.1} parent=1 // pred_fallthru
      _
    %v56 = vld [vmem:[#allocation2] sm:$0xff]
    %v57 = vld [vmem:[%s1] sm:$0xff]
    %v58 = vld [vmem:[%s1 + $0x8] sm:$0xff]
    %v59 = vld [vmem:[%s1 + $0x10] sm:$0xff]
    %v60 = vld [vmem:[%s1 + $0x18] sm:$0xff]
    %v61 = vld [vmem:[%s1 + $0x20] sm:$0xff]
    %v62 = vld [vmem:[%s1 + $0x28] sm:$0xff]
    %v63 = vld [vmem:[%s1 + $0x30] sm:$0xff]
    %v64 = vld [vmem:[%s1 + $0x38] sm:$0xff]
    %v65 = vld [vmem:[%s1 + $0x40] sm:$0xff]
    %v66 = vld [vmem:[%s1 + $0x48] sm:$0xff]
    %v67 = vld [vmem:[%s1 + $0x50] sm:$0xff]
    %v68 = vld [vmem:[%s1 + $0x58] sm:$0xff]
    %v69 = vld [vmem:[%s1 + $0x60] sm:$0xff]
    %v70 = vld [vmem:[%s1 + $0x68] sm:$0xff]
    %v71 = vld [vmem:[%s1 + $0x70] sm:$0xff]
    %v72 = vld [vmem:[%s1 + $0x78] sm:$0xff]
    %v73 = vld [vmem:[%s2] sm:$0x1]
    %v75 = vlaneseq
    %v76 = vshrl.u32 %v75, 7
    %v77 = vsub.s32 0, %v76
    %v78 = vrot.slane %v73, %v77
    %80 = vmatprep.subr.mxu0 0.0
    %81 = vmatpush1.msra.mxu0 %v57
    %82 = vmatprep.subr.mxu0 0.0
    %83 = vmatpush1.msra.mxu0 %v58
    %84 = vmatprep.subr.mxu0 0.0
    %85 = vmatpush1.msra.mxu0 %v59
    %86 = vmatprep.subr.mxu0 0.0
    %87 = vmatpush1.msra.mxu0 %v60
    %88 = vmatprep.subr.mxu0 0.0
    %89 = vmatpush1.msra.mxu0 %v61
    %90 = vmatprep.subr.mxu0 0.0
    %91 = vmatpush1.msra.mxu0 %v62
    %92 = vmatprep.subr.mxu0 0.0
    %93 = vmatpush1.msra.mxu0 %v63
    %94 = vmatprep.subr.mxu0 0.0
    %95 = vmatpush1.msra.mxu0 %v64
    %96 = vmatprep.subr.mxu0 0.0
    %97 = vmatpush1.msra.mxu0 %v65
    %98 = vmatprep.subr.mxu0 0.0
    %99 = vmatpush1.msra.mxu0 %v66
    %100 = vmatprep.subr.mxu0 0.0
    %101 = vmatpush1.msra.mxu0 %v67
    %102 = vmatprep.subr.mxu0 0.0
    %103 = vmatpush1.msra.mxu0 %v68
    %104 = vmatprep.subr.mxu0 0.0
    %105 = vmatpush1.msra.mxu0 %v69
    %106 = vmatprep.subr.mxu0 0.0
    %107 = vmatpush1.msra.mxu0 %v70
    %108 = vmatprep.subr.mxu0 0.0
    %109 = vmatpush1.msra.mxu0 %v71
    %110 = vmatprep.subr.mxu0 0.0
    %111 = vmatpush1.msra.mxu0 %v72
    %112 = vmatprep.subr.mxu0 0.0
    %113 = vmatpush1.msra.mxu0 0.0
    %114 = vmatprep.subr.mxu0 0.0
    %115 = vmatpush1.msra.mxu0 0.0
    %116 = vmatprep.subr.mxu0 0.0
    %117 = vmatpush1.msra.mxu0 0.0
    %118 = vmatprep.subr.mxu0 0.0
    %119 = vmatpush1.msra.mxu0 0.0
    %120 = vmatprep.subr.mxu0 0.0
    %121 = vmatpush1.msra.mxu0 0.0
    %122 = vmatprep.subr.mxu0 0.0
    %123 = vmatpush1.msra.mxu0 0.0
    %124 = vmatprep.subr.mxu0 0.0
    %125 = vmatpush1.msra.mxu0 0.0
    %126 = vmatprep.subr.mxu0 0.0
    %127 = vmatpush1.msra.mxu0 0.0
    %128 = vmatprep.subr.mxu0 0.0
    %129 = vmatpush1.msra.mxu0 0.0
    %130 = vmatprep.subr.mxu0 0.0
    %131 = vmatpush1.msra.mxu0 0.0
    %132 = vmatprep.subr.mxu0 0.0
    %133 = vmatpush1.msra.mxu0 0.0
    %134 = vmatprep.subr.mxu0 0.0
    %135 = vmatpush1.msra.mxu0 0.0
    %136 = vmatprep.subr.mxu0 0.0
    %137 = vmatpush1.msra.mxu0 0.0
    %138 = vmatprep.subr.mxu0 0.0
    %139 = vmatpush1.msra.mxu0 0.0
    %140 = vmatprep.subr.mxu0 0.0
    %141 = vmatpush1.msra.mxu0 0.0
    %142 = vmatprep.subr.mxu0 0.0
    %143 = vmatpush1.msra.mxu0 0.0
    %144 = vmatprep.mubr.f32.mxu0 0.0
    %145 = vmatmul.mubr.f32.gmra.mrb[0].mxu0 %v56
    %v146 = vpop.f32.mrb[0].mxu0
    %v147 = vadd.f32 %v78, %v146
    %v148 = vpop.f32.mrb[0].mxu0
    %149 = vdwg.mxu0
    %v150 = vmax.f32 %v147, 0.0
    %v151 = vld [vmem:[#allocation5] sm:$0xff]
    %v152 = vld [vmem:[#allocation5 + $0x8] sm:$0xff]
    %v153 = vld [vmem:[#allocation5 + $0x10] sm:$0xff]
    %v154 = vld [vmem:[#allocation5 + $0x18] sm:$0xff]
    %v155 = vld [vmem:[#allocation5 + $0x20] sm:$0xff]
    %v156 = vld [vmem:[#allocation5 + $0x28] sm:$0xff]
    %v157 = vld [vmem:[#allocation5 + $0x30] sm:$0xff]
    %v158 = vld [vmem:[#allocation5 + $0x38] sm:$0xff]
    %v159 = vld [vmem:[#allocation5 + $0x40] sm:$0xff]
    %v160 = vld [vmem:[#allocation5 + $0x48] sm:$0xff]
    %v161 = vld [vmem:[#allocation5 + $0x50] sm:$0xff]
    %v162 = vld [vmem:[#allocation5 + $0x58] sm:$0xff]
    %v163 = vld [vmem:[#allocation5 + $0x60] sm:$0xff]
    %v164 = vld [vmem:[#allocation5 + $0x68] sm:$0xff]
    %v165 = vld [vmem:[#allocation5 + $0x70] sm:$0xff]
    %v166 = vld [vmem:[#allocation5 + $0x78] sm:$0xff]
    %v167 = vld [vmem:[%s4] sm:$0x1]
    %v169 = vlaneseq
    %v170 = vshrl.u32 %v169, 7
    %v171 = vsub.s32 0, %v170
    %v172 = vrot.slane %v167, %v171
    %174 = vmatprep.subr.mxu0 0.0
    %175 = vmatpush1.msra.mxu0 %v151
    %176 = vmatprep.subr.mxu0 0.0
    %177 = vmatpush1.msra.mxu0 %v152
    %178 = vmatprep.subr.mxu0 0.0
    %179 = vmatpush1.msra.mxu0 %v153
    %180 = vmatprep.subr.mxu0 0.0
    %181 = vmatpush1.msra.mxu0 %v154
    %182 = vmatprep.subr.mxu0 0.0
    %183 = vmatpush1.msra.mxu0 %v155
    %184 = vmatprep.subr.mxu0 0.0
    %185 = vmatpush1.msra.mxu0 %v156
    %186 = vmatprep.subr.mxu0 0.0
    %187 = vmatpush1.msra.mxu0 %v157
    %188 = vmatprep.subr.mxu0 0.0
    %189 = vmatpush1.msra.mxu0 %v158
    %190 = vmatprep.subr.mxu0 0.0
    %191 = vmatpush1.msra.mxu0 %v159
    %192 = vmatprep.subr.mxu0 0.0
    %193 = vmatpush1.msra.mxu0 %v160
    %194 = vmatprep.subr.mxu0 0.0
    %195 = vmatpush1.msra.mxu0 %v161
    %196 = vmatprep.subr.mxu0 0.0
    %197 = vmatpush1.msra.mxu0 %v162
    %198 = vmatprep.subr.mxu0 0.0
    %199 = vmatpush1.msra.mxu0 %v163
    %200 = vmatprep.subr.mxu0 0.0
    %201 = vmatpush1.msra.mxu0 %v164
    %202 = vmatprep.subr.mxu0 0.0
    %203 = vmatpush1.msra.mxu0 %v165
    %204 = vmatprep.subr.mxu0 0.0
    %205 = vmatpush1.msra.mxu0 %v166
    %206 = vmatprep.subr.mxu0 0.0
    %207 = vmatpush1.msra.mxu0 0.0
    %208 = vmatprep.subr.mxu0 0.0
    %209 = vmatpush1.msra.mxu0 0.0
    %210 = vmatprep.subr.mxu0 0.0
    %211 = vmatpush1.msra.mxu0 0.0
    %212 = vmatprep.subr.mxu0 0.0
    %213 = vmatpush1.msra.mxu0 0.0
    %214 = vmatprep.subr.mxu0 0.0
    %215 = vmatpush1.msra.mxu0 0.0
    %216 = vmatprep.subr.mxu0 0.0
    %217 = vmatpush1.msra.mxu0 0.0
    %218 = vmatprep.subr.mxu0 0.0
    %219 = vmatpush1.msra.mxu0 0.0
    %220 = vmatprep.subr.mxu0 0.0
    %221 = vmatpush1.msra.mxu0 0.0
    %222 = vmatprep.subr.mxu0 0.0
    %223 = vmatpush1.msra.mxu0 0.0
    %224 = vmatprep.subr.mxu0 0.0
    %225 = vmatpush1.msra.mxu0 0.0
    %226 = vmatprep.subr.mxu0 0.0
    %227 = vmatpush1.msra.mxu0 0.0
    %228 = vmatprep.subr.mxu0 0.0
    %229 = vmatpush1.msra.mxu0 0.0
    %230 = vmatprep.subr.mxu0 0.0
    %231 = vmatpush1.msra.mxu0 0.0
    %232 = vmatprep.subr.mxu0 0.0
    %233 = vmatpush1.msra.mxu0 0.0
    %234 = vmatprep.subr.mxu0 0.0
    %235 = vmatpush1.msra.mxu0 0.0
    %236 = vmatprep.subr.mxu0 0.0
    %237 = vmatpush1.msra.mxu0 0.0
    %238 = vmatprep.mubr.f32.mxu0 0.0
    %239 = vmatmul.mubr.f32.gmra.mrb[0].mxu0 %v150
    %v240 = vpop.f32.mrb[0].mxu0
    %v241 = vadd.f32 %v172, %v240
    %v242 = vpop.f32.mrb[0].mxu0
    %243 = vdwg.mxu0
    %v244 = vmax.f32 %v241, 0.0
    %v245 = vld [vmem:[%s5] sm:$0xff]
    %v246 = vld [vmem:[%s5 + $0x8] sm:$0xff]
    %v247 = vld [vmem:[%s5 + $0x10] sm:$0xff]
    %v248 = vld [vmem:[%s5 + $0x18] sm:$0xff]
    %v249 = vld [vmem:[%s5 + $0x20] sm:$0xff]
    %v250 = vld [vmem:[%s5 + $0x28] sm:$0xff]
    %v251 = vld [vmem:[%s5 + $0x30] sm:$0xff]
    %v252 = vld [vmem:[%s5 + $0x38] sm:$0xff]
    %v253 = vld [vmem:[%s5 + $0x40] sm:$0xff]
    %v254 = vld [vmem:[%s5 + $0x48] sm:$0xff]
    %v255 = vld [vmem:[%s5 + $0x50] sm:$0xff]
    %v256 = vld [vmem:[%s5 + $0x58] sm:$0xff]
    %v257 = vld [vmem:[%s5 + $0x60] sm:$0xff]
    %v258 = vld [vmem:[%s5 + $0x68] sm:$0xff]
    %v259 = vld [vmem:[%s5 + $0x70] sm:$0xff]
    %v260 = vld [vmem:[%s5 + $0x78] sm:$0xff]
    %v261 = vld [vmem:[%s6] sm:$0x1]
    %v263 = vlaneseq
    %v264 = vshrl.u32 %v263, 7
    %v265 = vsub.s32 0, %v264
    %v266 = vrot.slane %v261, %v265
    %268 = vmatprep.subr.mxu0 0.0
    %269 = vmatpush1.msra.mxu0 %v245
    %270 = vmatprep.subr.mxu0 0.0
    %271 = vmatpush1.msra.mxu0 %v246
    %272 = vmatprep.subr.mxu0 0.0
    %273 = vmatpush1.msra.mxu0 %v247
    %274 = vmatprep.subr.mxu0 0.0
    %275 = vmatpush1.msra.mxu0 %v248
    %276 = vmatprep.subr.mxu0 0.0
    %277 = vmatpush1.msra.mxu0 %v249
    %278 = vmatprep.subr.mxu0 0.0
    %279 = vmatpush1.msra.mxu0 %v250
    %280 = vmatprep.subr.mxu0 0.0
    %281 = vmatpush1.msra.mxu0 %v251
    %282 = vmatprep.subr.mxu0 0.0
    %283 = vmatpush1.msra.mxu0 %v252
    %284 = vmatprep.subr.mxu0 0.0
    %285 = vmatpush1.msra.mxu0 %v253
    %286 = vmatprep.subr.mxu0 0.0
    %287 = vmatpush1.msra.mxu0 %v254
    %288 = vmatprep.subr.mxu0 0.0
    %289 = vmatpush1.msra.mxu0 %v255
    %290 = vmatprep.subr.mxu0 0.0
    %291 = vmatpush1.msra.mxu0 %v256
    %292 = vmatprep.subr.mxu0 0.0
    %293 = vmatpush1.msra.mxu0 %v257
    %294 = vmatprep.subr.mxu0 0.0
    %295 = vmatpush1.msra.mxu0 %v258
    %296 = vmatprep.subr.mxu0 0.0
    %297 = vmatpush1.msra.mxu0 %v259
    %298 = vmatprep.subr.mxu0 0.0
    %299 = vmatpush1.msra.mxu0 %v260
    %300 = vmatprep.subr.mxu0 0.0
    %301 = vmatpush1.msra.mxu0 0.0
    %302 = vmatprep.subr.mxu0 0.0
    %303 = vmatpush1.msra.mxu0 0.0
    %304 = vmatprep.subr.mxu0 0.0
    %305 = vmatpush1.msra.mxu0 0.0
    %306 = vmatprep.subr.mxu0 0.0
    %307 = vmatpush1.msra.mxu0 0.0
    %308 = vmatprep.subr.mxu0 0.0
    %309 = vmatpush1.msra.mxu0 0.0
    %310 = vmatprep.subr.mxu0 0.0
    %311 = vmatpush1.msra.mxu0 0.0
    %312 = vmatprep.subr.mxu0 0.0
    %313 = vmatpush1.msra.mxu0 0.0
    %314 = vmatprep.subr.mxu0 0.0
    %315 = vmatpush1.msra.mxu0 0.0
    %316 = vmatprep.subr.mxu0 0.0
    %317 = vmatpush1.msra.mxu0 0.0
    %318 = vmatprep.subr.mxu0 0.0
    %319 = vmatpush1.msra.mxu0 0.0
    %320 = vmatprep.subr.mxu0 0.0
    %321 = vmatpush1.msra.mxu0 0.0
    %322 = vmatprep.subr.mxu0 0.0
    %323 = vmatpush1.msra.mxu0 0.0
    %324 = vmatprep.subr.mxu0 0.0
    %325 = vmatpush1.msra.mxu0 0.0
    %326 = vmatprep.subr.mxu0 0.0
    %327 = vmatpush1.msra.mxu0 0.0
    %328 = vmatprep.subr.mxu0 0.0
    %329 = vmatpush1.msra.mxu0 0.0
    %330 = vmatprep.subr.mxu0 0.0
    %331 = vmatpush1.msra.mxu0 0.0
    %332 = vmatprep.mubr.f32.mxu0 0.0
    %333 = vmatmul.mubr.f32.gmra.mrb[0].mxu0 %v244
    %v334 = vpop.f32.mrb[0].mxu0
    %v335 = vadd.f32 %v266, %v334
    %v336 = vpop.f32.mrb[0].mxu0
    %337 = vdwg.mxu0
    %vm338 = vcmask 130048
    %339 = vst.msk [vmem:[#allocation7] sm:$0xff] %vm338, %v335
    // Predicated region
    $region42: #{tpu_custom_call.1} parent=1 // pred_check
      _
    $region43: #{tpu_custom_call.1} parent=1 // pred_check_branch
      %341 = sbr.rel (0) target = $region45
    $region44: #{tpu_custom_call.1} parent=1 // pred_region
      %s343 = ssub.s32 128, 128
      %344 = vsyncadd [#allocation4], %s343
      %s346 = sshll.u32 [#allocation7], 4
      %s347 = int_to_ptr.vmem [resolvable:$true] %s346
      %349 = dma.vmem_to_hbm [thread:$0]  %s347, 128, %s8, [#allocation4]
    $region45: #{tpu_custom_call.1} parent=1 // pred_fallthru
      _
    // Predicated region
    $region46: #{tpu_custom_call.1} parent=1 // pred_check
      _
    $region47: #{tpu_custom_call.1} parent=1 // pred_check_branch
      %351 = sbr.rel (0) target = $region49
    $region48: #{tpu_custom_call.1} parent=1 // pred_region
      %352 = dma.done [#allocation4], 128
    $region49: #{tpu_custom_call.1} parent=1 // pred_fallthru
      _
    %353 = vsyncpa [#allocation3], 1
    %354 = vsyncpa [#allocation6], 1
    %355 = vsyncpa [#allocation4], 1

</llo_original>
